<compile_context>
chip_gen: v6e
topology: v6e:2x2x1
jax: 0.10.0
libtpu: 0.0.40
codegen_flags: <defaults>
</compile_context>

<pallas_src>
import functools

import jax
import jax.numpy as jnp
from jax.experimental import pallas as pl
from jax.experimental.pallas import tpu as pltpu


def _round_up(n, m):
    return ((n + m - 1) // m) * m


# ---------------------------------------------------------------------------
# Kernel
# ---------------------------------------------------------------------------
def decoder_rnn_kernel(T,              # static: number of real decode steps
                       tok_ref,        # scalar-prefetch: int32[T] token ids (SMEM)
                       emb_ref,        # (Oe, Hp)  f32   full embedding table (VMEM-resident)
                       h0_ref,         # (1, Hp)   f32   initial hidden state
                       wih_ref,        # (Hp, 3Hp) bf16  fused GRU input weights  [r|z|n]
                       whh_ref,        # (Hp, 3Hp) bf16  fused GRU hidden weights [r|z|n]
                       bih_ref,        # (1, 3Hp)  f32
                       bhh_ref,        # (1, 3Hp)  f32
                       wout_ref,       # (Hp, Op)  bf16  output Linear (transposed)
                       bout_ref,       # (1, Op)   f32   (-1e30 in padded lanes)
                       logp_ref,       # out: (Tp, Op) f32  log-probs (rows >= T garbage-free, sliced off outside)
                       hN_ref,         # out: (1, Hp)  f32  final hidden state
                       x_scr,          # scratch: (Tp, Hp)  f32  relu(embedding) rows
                       gi_scr,         # scratch: (Tp, 3Hp) f32  input-side pre-activations
                       h_scr,          # scratch: (1, Hp)   f32  hidden carry
                       h_all_scr):     # scratch: (Tp, Hp)  f32  all step hiddens
    Hp = h0_ref.shape[1]

    # Init (once; grid has a single step).
    h_scr[...] = h0_ref[...]
    x_scr[...] = jnp.zeros_like(x_scr)
    h_all_scr[...] = jnp.zeros_like(h_all_scr)

    # Gather + relu the T embedding rows from the resident VMEM table
    # (tiny VMEM->VMEM row copies, no per-step HBM DMAs).
    @pl.loop(0, T)
    def _(t):
        tok = tok_ref[t]
        row = emb_ref[pl.ds(tok, 1), :]                       # (1, Hp) f32
        x_scr[pl.ds(t, 1), :] = jnp.maximum(row, 0.0)         # F.relu(embedding(input))

    # Input-side pre-activations for ALL steps: one (Tp,Hp)x(Hp,3Hp) MXU matmul.
    gi_scr[...] = jnp.dot(x_scr[...].astype(jnp.bfloat16), wih_ref[...],
                          preferred_element_type=jnp.float32) + bih_ref[...]

    # Sequential GRU recurrence (PyTorch semantics); one fused matmul per step.
    @pl.loop(0, T)
    def _(t):
        h32 = h_scr[...]                                      # (1, Hp) f32
        gh = jnp.dot(h32.astype(jnp.bfloat16), whh_ref[...],
                     preferred_element_type=jnp.float32) + bhh_ref[...]   # (1, 3Hp)
        gi = gi_scr[pl.ds(t, 1), :]                           # (1, 3Hp)

        # 128-lane-aligned gate slices (r | z | n) -> no cross-tile slicing.
        r = jax.nn.sigmoid(gi[:, :Hp] + gh[:, :Hp])
        z = jax.nn.sigmoid(gi[:, Hp:2 * Hp] + gh[:, Hp:2 * Hp])
        n = jnp.tanh(gi[:, 2 * Hp:] + r * gh[:, 2 * Hp:])     # b_hn stays inside r*(W_hn h + b_hn)
        h_new = (1.0 - z) * n + z * h32                       # padded lanes stay exactly 0

        h_scr[...] = h_new
        h_all_scr[pl.ds(t, 1), :] = h_new

    # Final hidden written exactly once.
    hN_ref[...] = h_scr[...]

    # Batched output Linear + log_softmax on the (Tp, Op) slab, one lane-dense store.
    logits = jnp.dot(h_all_scr[...].astype(jnp.bfloat16), wout_ref[...],
                     preferred_element_type=jnp.float32) + bout_ref[...]   # (Tp, Op)
    m = jnp.max(logits, axis=-1, keepdims=True)
    s = logits - m
    lse = jnp.log(jnp.sum(jnp.exp(s), axis=-1, keepdims=True))
    logp_ref[...] = s - lse


# ---------------------------------------------------------------------------
# Wrappers
# ---------------------------------------------------------------------------
@functools.partial(jax.jit, static_argnames=("h_size", "o_size"))
def decoder_rnn_decode(tokens, hidden, kparams, *, h_size, o_size):
    """Run T chained DecoderRNN.forward steps in one pallas_call.

    tokens: int32[T]; hidden: f32[1, 1, H].
    Returns (log_probs f32[T, O], final hidden f32[1, 1, H]).
    """
    emb_p, wih_f, whh_f, bih_f, bhh_f, wout_p, bout_p = kparams
    T = tokens.shape[0]
    Tp = _round_up(T, 8)
    Oe, Hp = emb_p.shape
    Op = wout_p.shape[1]

    h0 = jnp.zeros((1, Hp), jnp.float32).at[:, :h_size].set(
        hidden.reshape(1, h_size))

    grid_spec = pltpu.PrefetchScalarGridSpec(
        num_scalar_prefetch=1,
        grid=(1,),   # single program: the whole decode loop runs in-kernel
        in_specs=[
            # all inputs are fetched once and stay VMEM-resident
            pl.BlockSpec((Oe, Hp), lambda i, tok: (0, 0)),        # embedding table
            pl.BlockSpec((1, Hp), lambda i, tok: (0, 0)),         # h0
            pl.BlockSpec((Hp, 3 * Hp), lambda i, tok: (0, 0)),    # W_ih fused
            pl.BlockSpec((Hp, 3 * Hp), lambda i, tok: (0, 0)),    # W_hh fused
            pl.BlockSpec((1, 3 * Hp), lambda i, tok: (0, 0)),     # b_ih fused
            pl.BlockSpec((1, 3 * Hp), lambda i, tok: (0, 0)),     # b_hh fused
            pl.BlockSpec((Hp, Op), lambda i, tok: (0, 0)),        # W_out^T
            pl.BlockSpec((1, Op), lambda i, tok: (0, 0)),         # b_out (padded lanes -1e30)
        ],
        out_specs=[
            pl.BlockSpec((Tp, Op), lambda i, tok: (0, 0)),        # lane-dense log-prob slab
            pl.BlockSpec((1, Hp), lambda i, tok: (0, 0)),         # final hidden
        ],
        scratch_shapes=[
            pltpu.VMEM((Tp, Hp), jnp.float32),      # relu(embedding) rows
            pltpu.VMEM((Tp, 3 * Hp), jnp.float32),  # GI pre-activations
            pltpu.VMEM((1, Hp), jnp.float32),       # hidden carry
            pltpu.VMEM((Tp, Hp), jnp.float32),      # all step hiddens
        ],
    )

    # Advisory cost estimate (batched matmuls dominate).
    flops = (2 * Tp * Hp * 3 * Hp          # GI matmul
             + 2 * T * Hp * 3 * Hp         # GH matmuls (sequential)
             + 2 * Tp * Hp * Op)           # output Linear
    transcendentals = T * 3 * Hp + Tp * Op
    bytes_accessed = ((emb_p.size + h0.size + bih_f.size + bhh_f.size + bout_p.size) * 4
                      + (wih_f.size + whh_f.size + wout_p.size) * 2
                      + (Tp * Op + Hp) * 4 + T * 4)

    logp_pad, h_final = pl.pallas_call(
        functools.partial(decoder_rnn_kernel, T),
        out_shape=(jax.ShapeDtypeStruct((Tp, Op), jnp.float32),
                   jax.ShapeDtypeStruct((1, Hp), jnp.float32)),
        grid_spec=grid_spec,
        compiler_params=pltpu.CompilerParams(
            dimension_semantics=("arbitrary",)),
        cost_estimate=pl.CostEstimate(flops=flops,
                                      transcendentals=transcendentals,
                                      bytes_accessed=bytes_accessed),
    )(tokens, emb_p, h0, wih_f, whh_f, bih_f, bhh_f, wout_p, bout_p)

    return logp_pad[:T, :o_size], h_final[:, :h_size].reshape(1, 1, h_size)


def decoder_rnn_forward(token, hidden, kparams, *, h_size, o_size):
    """Single-step forward matching DecoderRNN.forward(input, hidden)."""
    return decoder_rnn_decode(token.reshape(1), hidden, kparams,
                              h_size=h_size, o_size=o_size)


# ---------------------------------------------------------------------------
# Parameters (canonical PyTorch layout) and kernel-layout preparation
# ---------------------------------------------------------------------------
def init_params(key, h_size, o_size):
    ks = jax.random.split(key, 7)
    bound = float(h_size) ** -0.5
    u = lambda k, shape: jax.random.uniform(k, shape, jnp.float32, -bound, bound)
    emb = jax.random.normal(ks[0], (o_size, h_size), jnp.float32)   # nn.Embedding
    w_ih = u(ks[1], (3 * h_size, h_size))    # GRU weight_ih_l0, gates [r|z|n]
    w_hh = u(ks[2], (3 * h_size, h_size))    # GRU weight_hh_l0
    b_ih = u(ks[3], (3 * h_size,))
    b_hh = u(ks[4], (3 * h_size,))
    w_out = u(ks[5], (o_size, h_size))       # nn.Linear(h, o).weight
    b_out = u(ks[6], (o_size,))
    return (emb, w_ih, w_hh, b_ih, b_hh, w_out, b_out)


def prep_kernel_params(params, h_size, o_size):
    """Pad to (8,128)-aligned tiles, fuse GRU gates along lanes, bf16 matmul weights."""
    emb, w_ih, w_hh, b_ih, b_hh, w_out, b_out = params
    Hp = _round_up(h_size, 128)
    Op = _round_up(o_size, 128)
    Oe = _round_up(o_size, 8)

    def pad2(x, rows, cols, fill=0.0):
        out = jnp.full((rows, cols), fill, jnp.float32)
        return out.at[:x.shape[0], :x.shape[1]].set(x)

    emb_p = pad2(emb, Oe, Hp)                                          # (Oe, Hp) f32

    def fuse_w(w):   # PyTorch (3H, H) -> (Hp, 3Hp) transposed, gate g in cols [g*Hp:(g+1)*Hp]
        gates = [pad2(w[g * h_size:(g + 1) * h_size, :].T, Hp, Hp) for g in range(3)]
        return jnp.concatenate(gates, axis=1).astype(jnp.bfloat16)

    def fuse_b(b):   # (3H,) -> (1, 3Hp) f32
        gates = [pad2(b[g * h_size:(g + 1) * h_size].reshape(1, h_size), 1, Hp)
                 for g in range(3)]
        return jnp.concatenate(gates, axis=1)

    wih_f = fuse_w(w_ih)
    whh_f = fuse_w(w_hh)
    bih_f = fuse_b(b_ih)
    bhh_f = fuse_b(b_hh)

    wout_p = pad2(w_out.T, Hp, Op).astype(jnp.bfloat16)                # (Hp, Op)
    # padded logit lanes get a huge negative bias -> exp() == 0 in the softmax
    bout_p = jnp.full((1, Op), -1e30, jnp.float32).at[:, :o_size].set(
        b_out.reshape(1, o_size))
    return (emb_p, wih_f, whh_f, bih_f, bhh_f, wout_p, bout_p)


# ---------------------------------------------------------------------------
# Pure-JAX reference (PyTorch semantics; matmul operands rounded to bf16 to
# match the kernel's bf16-weight / f32-accumulate numerics)
# ---------------------------------------------------------------------------
def reference_decode(tokens, hidden, params, h_size, o_size):
    emb, w_ih, w_hh, b_ih, b_hh, w_out, b_out = params
    bf = lambda a: a.astype(jnp.bfloat16)
    w_ih_t = bf(w_ih.T)      # (H, 3H)
    w_hh_t = bf(w_hh.T)
    w_out_t = bf(w_out.T)    # (H, O)
    H = h_size
    h = hidden.reshape(1, H)
    outs = []
    for t in range(tokens.shape[0]):
        x = jnp.maximum(emb[tokens[t]].reshape(1, H), 0.0)
        gi = jnp.dot(bf(x), w_ih_t, preferred_element_type=jnp.float32) + b_ih.reshape(1, -1)
        gh = jnp.dot(bf(h), w_hh_t, preferred_element_type=jnp.float32) + b_hh.reshape(1, -1)
        r = jax.nn.sigmoid(gi[:, :H] + gh[:, :H])
        z = jax.nn.sigmoid(gi[:, H:2 * H] + gh[:, H:2 * H])
        n = jnp.tanh(gi[:, 2 * H:] + r * gh[:, 2 * H:])
        h = (1.0 - z) * n + z * h
        logits = jnp.dot(bf(h), w_out_t, preferred_element_type=jnp.float32) + b_out.reshape(1, -1)
        outs.append(jax.nn.log_softmax(logits, axis=1))
    return jnp.concatenate(outs, axis=0), h.reshape(1, 1, H)


if __name__ == "__main__":
    h_size, o_size, T = 32, 64, 8
    key = jax.random.PRNGKey(0)
    kp, kt = jax.random.split(key, 2)

    params = init_params(kp, h_size, o_size)
    kparams = prep_kernel_params(params, h_size, o_size)

    tokens = jax.random.randint(kt, (T,), 0, o_size, dtype=jnp.int32)
    hidden = jnp.zeros((1, 1, h_size), jnp.float32)   # initHidden()

    # Fused T-step decode (one pallas_call, one grid step, everything VMEM-resident).
    log_probs, h_final = decoder_rnn_decode(tokens, hidden, kparams,
                                            h_size=h_size, o_size=o_size)
    jax.block_until_ready((log_probs, h_final))

    ref_lp, ref_h = reference_decode(tokens, hidden, params, h_size, o_size)
    assert log_probs.shape == (T, o_size) and h_final.shape == (1, 1, h_size)
    assert jnp.allclose(log_probs, ref_lp, atol=1e-3, rtol=1e-3), \
        float(jnp.max(jnp.abs(log_probs - ref_lp)))
    assert jnp.allclose(h_final, ref_h, atol=1e-3, rtol=1e-3), \
        float(jnp.max(jnp.abs(h_final - ref_h)))

    # Single-step API matching DecoderRNN.forward(input, hidden).
    lp1, _ = decoder_rnn_forward(tokens[:1], hidden, kparams,
                                 h_size=h_size, o_size=o_size)
    jax.block_until_ready(lp1)
    assert lp1.shape == (1, o_size)
    assert jnp.allclose(lp1, log_probs[:1], atol=1e-3, rtol=1e-3)

    print("KERNEL_OK")
</pallas_src>

<mosaic_0001>
module attributes {stable_mosaic.version = 11 : i64} {
  func.func @decoder_rnn_kernel(%arg0: i32, %arg1: memref<8xi32, #tpu.memory_space<smem>>, %arg2: memref<64x128xf32, #tpu.memory_space<vmem>>, %arg3: memref<1x128xf32, #tpu.memory_space<vmem>>, %arg4: memref<128x384xbf16, #tpu.memory_space<vmem>>, %arg5: memref<128x384xbf16, #tpu.memory_space<vmem>>, %arg6: memref<1x384xf32, #tpu.memory_space<vmem>>, %arg7: memref<1x384xf32, #tpu.memory_space<vmem>>, %arg8: memref<128x128xbf16, #tpu.memory_space<vmem>>, %arg9: memref<1x128xf32, #tpu.memory_space<vmem>>, %arg10: memref<8x128xf32, #tpu.memory_space<vmem>>, %arg11: memref<1x128xf32, #tpu.memory_space<vmem>>, %arg12: memref<8x128xf32, #tpu.memory_space<vmem>>, %arg13: memref<8x384xf32, #tpu.memory_space<vmem>>, %arg14: memref<1x128xf32, #tpu.memory_space<vmem>>, %arg15: memref<8x128xf32, #tpu.memory_space<vmem>>) attributes {dimension_semantics = [#tpu.dimension_semantics<arbitrary>], iteration_bounds = array<i64: 1>, scalar_prefetch = 1 : i64, scratch_operands = 4 : i64, tpu.core_type = #tpu.core_type<tc>, window_params = [{pipeline_mode = #tpu.pipeline_mode<synchronous>, transform_indices = @transform_0, window_bounds = array<i64: 64, 128>}, {pipeline_mode = #tpu.pipeline_mode<synchronous>, transform_indices = @transform_1, window_bounds = array<i64: 1, 128>}, {pipeline_mode = #tpu.pipeline_mode<synchronous>, transform_indices = @transform_2, window_bounds = array<i64: 128, 384>}, {pipeline_mode = #tpu.pipeline_mode<synchronous>, transform_indices = @transform_3, window_bounds = array<i64: 128, 384>}, {pipeline_mode = #tpu.pipeline_mode<synchronous>, transform_indices = @transform_4, window_bounds = array<i64: 1, 384>}, {pipeline_mode = #tpu.pipeline_mode<synchronous>, transform_indices = @transform_5, window_bounds = array<i64: 1, 384>}, {pipeline_mode = #tpu.pipeline_mode<synchronous>, transform_indices = @transform_6, window_bounds = array<i64: 128, 128>}, {pipeline_mode = #tpu.pipeline_mode<synchronous>, transform_indices = @transform_7, window_bounds = array<i64: 1, 128>}, {pipeline_mode = #tpu.pipeline_mode<synchronous>, transform_indices = @transform_8, window_bounds = array<i64: 8, 128>}, {pipeline_mode = #tpu.pipeline_mode<synchronous>, transform_indices = @transform_9, window_bounds = array<i64: 1, 128>}]} {
    %c0 = arith.constant 0 : index
    %c0_0 = arith.constant 0 : index
    %0 = vector.load %arg3[%c0, %c0_0] : memref<1x128xf32, #tpu.memory_space<vmem>>, vector<1x128xf32>
    %c0_1 = arith.constant 0 : index
    %c0_2 = arith.constant 0 : index
    %1 = vector.load %arg14[%c0_1, %c0_2] : memref<1x128xf32, #tpu.memory_space<vmem>>, vector<1x128xf32>
    tpu.vector_store %arg14[%c0_1, %c0_2], %0 {strides = array<i32>} : memref<1x128xf32, #tpu.memory_space<vmem>>, vector<1x128xf32>,
    %cst = arith.constant 0.000000e+00 : f32
    %2 = vector.broadcast %cst : f32 to vector<8x128xf32>
    %c0_3 = arith.constant 0 : index
    %c0_4 = arith.constant 0 : index
    %3 = vector.load %arg12[%c0_3, %c0_4] : memref<8x128xf32, #tpu.memory_space<vmem>>, vector<8x128xf32>
    tpu.vector_store %arg12[%c0_3, %c0_4], %2 {strides = array<i32>} : memref<8x128xf32, #tpu.memory_space<vmem>>, vector<8x128xf32>,
    %cst_5 = arith.constant 0.000000e+00 : f32
    %4 = vector.broadcast %cst_5 : f32 to vector<8x128xf32>
    %c0_6 = arith.constant 0 : index
    %c0_7 = arith.constant 0 : index
    %5 = vector.load %arg15[%c0_6, %c0_7] : memref<8x128xf32, #tpu.memory_space<vmem>>, vector<8x128xf32>
    tpu.vector_store %arg15[%c0_6, %c0_7], %4 {strides = array<i32>} : memref<8x128xf32, #tpu.memory_space<vmem>>, vector<8x128xf32>,
    %c0_i32 = arith.constant 0 : i32
    %c8_i32 = arith.constant 8 : i32
    %6 = arith.addi %c0_i32, %c8_i32 : i32
    %c1_i32 = arith.constant 1 : i32
    scf.for %arg16 = %c0_i32 to %6 step %c1_i32  : i32 {
      %c1_i32_37 = arith.constant 1 : i32
      %36 = arith.muli %arg16, %c1_i32_37 : i32
      %c0_i32_38 = arith.constant 0 : i32
      %37 = arith.addi %c0_i32_38, %36 : i32
      %38 = arith.index_cast %37 : i32 to index
      %39 = memref.load %arg1[%38] : memref<8xi32, #tpu.memory_space<smem>>
      %40 = arith.index_cast %39 : i32 to index
      %c0_39 = arith.constant 0 : index
      %41 = vector.load %arg2[%40, %c0_39] : memref<64x128xf32, #tpu.memory_space<vmem>>, vector<1x128xf32>
      %cst_40 = arith.constant 0.000000e+00 : f32
      %42 = vector.broadcast %cst_40 : f32 to vector<1x128xf32>
      %43 = arith.maximumf %41, %42 : vector<1x128xf32>
      %44 = arith.index_cast %37 : i32 to index
      %c0_41 = arith.constant 0 : index
      %45 = vector.load %arg12[%44, %c0_41] : memref<8x128xf32, #tpu.memory_space<vmem>>, vector<1x128xf32>
      tpu.vector_store %arg12[%44, %c0_41], %43 {strides = array<i32>} : memref<8x128xf32, #tpu.memory_space<vmem>>, vector<1x128xf32>,
    }
    %c8_i32_8 = arith.constant 8 : i32
    %c0_9 = arith.constant 0 : index
    %c0_10 = arith.constant 0 : index
    %7 = vector.load %arg12[%c0_9, %c0_10] : memref<8x128xf32, #tpu.memory_space<vmem>>, vector<8x128xf32>
    %8 = arith.truncf %7 : vector<8x128xf32> to vector<8x128xbf16>
    %c0_11 = arith.constant 0 : index
    %c0_12 = arith.constant 0 : index
    %9 = vector.load %arg4[%c0_11, %c0_12] : memref<128x384xbf16, #tpu.memory_space<vmem>>, vector<128x384xbf16>
    %cst_13 = arith.constant dense<0.000000e+00> : vector<8x384xf32>
    %10 = tpu.matmul %8, %9, %cst_13 {dimension_numbers = #tpu.dot_dimension_numbers<[1], [0], [0], [1], [0, 0, 1, 1], [], []>} : vector<8x128xbf16>, vector<128x384xbf16>, vector<8x384xf32> -> vector<8x384xf32>
    %c0_14 = arith.constant 0 : index
    %c0_15 = arith.constant 0 : index
    %11 = vector.load %arg6[%c0_14, %c0_15] : memref<1x384xf32, #tpu.memory_space<vmem>>, vector<1x384xf32>
    %12 = vector.broadcast %11 : vector<1x384xf32> to vector<8x384xf32>
    %13 = arith.addf %10, %12 : vector<8x384xf32>
    %c0_16 = arith.constant 0 : index
    %c0_17 = arith.constant 0 : index
    %14 = vector.load %arg13[%c0_16, %c0_17] : memref<8x384xf32, #tpu.memory_space<vmem>>, vector<8x384xf32>
    tpu.vector_store %arg13[%c0_16, %c0_17], %13 {strides = array<i32>} : memref<8x384xf32, #tpu.memory_space<vmem>>, vector<8x384xf32>,
    %c0_i32_18 = arith.constant 0 : i32
    %c8_i32_19 = arith.constant 8 : i32
    %15 = arith.addi %c0_i32_18, %c8_i32_19 : i32
    %c1_i32_20 = arith.constant 1 : i32
    scf.for %arg16 = %c0_i32_18 to %15 step %c1_i32_20  : i32 {
      %c1_i32_37 = arith.constant 1 : i32
      %36 = arith.muli %arg16, %c1_i32_37 : i32
      %c0_i32_38 = arith.constant 0 : i32
      %37 = arith.addi %c0_i32_38, %36 : i32
      %c0_39 = arith.constant 0 : index
      %c0_40 = arith.constant 0 : index
      %38 = vector.load %arg14[%c0_39, %c0_40] : memref<1x128xf32, #tpu.memory_space<vmem>>, vector<1x128xf32>
      %39 = arith.truncf %38 : vector<1x128xf32> to vector<1x128xbf16>
      %c0_41 = arith.constant 0 : index
      %c0_42 = arith.constant 0 : index
      %40 = vector.load %arg5[%c0_41, %c0_42] : memref<128x384xbf16, #tpu.memory_space<vmem>>, vector<128x384xbf16>
      %cst_43 = arith.constant dense<0.000000e+00> : vector<1x384xf32>
      %41 = tpu.matmul %39, %40, %cst_43 {dimension_numbers = #tpu.dot_dimension_numbers<[1], [0], [0], [1], [0, 0, 1, 1], [], []>} : vector<1x128xbf16>, vector<128x384xbf16>, vector<1x384xf32> -> vector<1x384xf32>
      %c0_44 = arith.constant 0 : index
      %c0_45 = arith.constant 0 : index
      %42 = vector.load %arg7[%c0_44, %c0_45] : memref<1x384xf32, #tpu.memory_space<vmem>>, vector<1x384xf32>
      %43 = arith.addf %41, %42 : vector<1x384xf32>
      %44 = arith.index_cast %37 : i32 to index
      %c0_46 = arith.constant 0 : index
      %45 = vector.load %arg13[%44, %c0_46] : memref<8x384xf32, #tpu.memory_space<vmem>>, vector<1x384xf32>
      %46 = vector.extract_strided_slice %45 {offsets = [0, 0], sizes = [1, 128], strides = [1, 1]} : vector<1x384xf32> to vector<1x128xf32>
      %47 = vector.extract_strided_slice %43 {offsets = [0, 0], sizes = [1, 128], strides = [1, 1]} : vector<1x384xf32> to vector<1x128xf32>
      %48 = arith.addf %46, %47 : vector<1x128xf32>
      %49 = arith.negf %48 : vector<1x128xf32>
      %50 = math.exp %49 : vector<1x128xf32>
      %cst_47 = arith.constant 1.000000e+00 : f32
      %51 = vector.broadcast %cst_47 : f32 to vector<1x128xf32>
      %52 = arith.addf %51, %50 : vector<1x128xf32>
      %53 = arith.divf %51, %52 : vector<1x128xf32>
      %54 = vector.extract_strided_slice %45 {offsets = [0, 128], sizes = [1, 128], strides = [1, 1]} : vector<1x384xf32> to vector<1x128xf32>
      %55 = vector.extract_strided_slice %43 {offsets = [0, 128], sizes = [1, 128], strides = [1, 1]} : vector<1x384xf32> to vector<1x128xf32>
      %56 = arith.addf %54, %55 : vector<1x128xf32>
      %57 = arith.negf %56 : vector<1x128xf32>
      %58 = math.exp %57 : vector<1x128xf32>
      %cst_48 = arith.constant 1.000000e+00 : f32
      %59 = vector.broadcast %cst_48 : f32 to vector<1x128xf32>
      %60 = arith.addf %59, %58 : vector<1x128xf32>
      %61 = arith.divf %59, %60 : vector<1x128xf32>
      %62 = vector.extract_strided_slice %45 {offsets = [0, 256], sizes = [1, 128], strides = [1, 1]} : vector<1x384xf32> to vector<1x128xf32>
      %63 = vector.extract_strided_slice %43 {offsets = [0, 256], sizes = [1, 128], strides = [1, 1]} : vector<1x384xf32> to vector<1x128xf32>
      %64 = arith.mulf %53, %63 : vector<1x128xf32>
      %65 = arith.addf %62, %64 : vector<1x128xf32>
      %66 = math.tanh %65 : vector<1x128xf32>
      %cst_49 = arith.constant 1.000000e+00 : f32
      %67 = vector.broadcast %cst_49 : f32 to vector<1x128xf32>
      %68 = arith.subf %67, %61 : vector<1x128xf32>
      %69 = arith.mulf %68, %66 : vector<1x128xf32>
      %70 = arith.mulf %61, %38 : vector<1x128xf32>
      %71 = arith.addf %69, %70 : vector<1x128xf32>
      %c0_50 = arith.constant 0 : index
      %c0_51 = arith.constant 0 : index
      %72 = vector.load %arg14[%c0_50, %c0_51] : memref<1x128xf32, #tpu.memory_space<vmem>>, vector<1x128xf32>
      tpu.vector_store %arg14[%c0_50, %c0_51], %71 {strides = array<i32>} : memref<1x128xf32, #tpu.memory_space<vmem>>, vector<1x128xf32>,
      %73 = arith.index_cast %37 : i32 to index
      %c0_52 = arith.constant 0 : index
      %74 = vector.load %arg15[%73, %c0_52] : memref<8x128xf32, #tpu.memory_space<vmem>>, vector<1x128xf32>
      tpu.vector_store %arg15[%73, %c0_52], %71 {strides = array<i32>} : memref<8x128xf32, #tpu.memory_space<vmem>>, vector<1x128xf32>,
    }
    %c8_i32_21 = arith.constant 8 : i32
    %c0_22 = arith.constant 0 : index
    %c0_23 = arith.constant 0 : index
    %16 = vector.load %arg14[%c0_22, %c0_23] : memref<1x128xf32, #tpu.memory_space<vmem>>, vector<1x128xf32>
    %c0_24 = arith.constant 0 : index
    %c0_25 = arith.constant 0 : index
    %17 = vector.load %arg11[%c0_24, %c0_25] : memref<1x128xf32, #tpu.memory_space<vmem>>, vector<1x128xf32>
    tpu.vector_store %arg11[%c0_24, %c0_25], %16 {strides = array<i32>} : memref<1x128xf32, #tpu.memory_space<vmem>>, vector<1x128xf32>,
    %c0_26 = arith.constant 0 : index
    %c0_27 = arith.constant 0 : index
    %18 = vector.load %arg15[%c0_26, %c0_27] : memref<8x128xf32, #tpu.memory_space<vmem>>, vector<8x128xf32>
    %19 = arith.truncf %18 : vector<8x128xf32> to vector<8x128xbf16>
    %c0_28 = arith.constant 0 : index
    %c0_29 = arith.constant 0 : index
    %20 = vector.load %arg8[%c0_28, %c0_29] : memref<128x128xbf16, #tpu.memory_space<vmem>>, vector<128x128xbf16>
    %cst_30 = arith.constant dense<0.000000e+00> : vector<8x128xf32>
    %21 = tpu.matmul %19, %20, %cst_30 {dimension_numbers = #tpu.dot_dimension_numbers<[1], [0], [0], [1], [0, 0, 1, 1], [], []>} : vector<8x128xbf16>, vector<128x128xbf16>, vector<8x128xf32> -> vector<8x128xf32>
    %c0_31 = arith.constant 0 : index
    %c0_32 = arith.constant 0 : index
    %22 = vector.load %arg9[%c0_31, %c0_32] : memref<1x128xf32, #tpu.memory_space<vmem>>, vector<1x128xf32>
    %23 = vector.broadcast %22 : vector<1x128xf32> to vector<8x128xf32>
    %24 = arith.addf %21, %23 : vector<8x128xf32>
    %cst_33 = arith.constant dense<0xFF800000> : vector<8xf32>
    %25 = vector.multi_reduction <maximumf>, %24, %cst_33 [1] : vector<8x128xf32> to vector<8xf32>
    %26 = vector.shape_cast %25 : vector<8xf32> to vector<8x1xf32>
    %27 = vector.broadcast %26 : vector<8x1xf32> to vector<8x128xf32>
    %28 = arith.subf %24, %27 : vector<8x128xf32>
    %29 = math.exp %28 : vector<8x128xf32>
    %cst_34 = arith.constant dense<0.000000e+00> : vector<8xf32>
    %30 = vector.multi_reduction <add>, %29, %cst_34 [1] : vector<8x128xf32> to vector<8xf32>
    %31 = vector.shape_cast %30 : vector<8xf32> to vector<8x1xf32>
    %32 = math.log %31 : vector<8x1xf32>
    %33 = vector.broadcast %32 : vector<8x1xf32> to vector<8x128xf32>
    %34 = arith.subf %28, %33 : vector<8x128xf32>
    %c0_35 = arith.constant 0 : index
    %c0_36 = arith.constant 0 : index
    %35 = vector.load %arg10[%c0_35, %c0_36] : memref<8x128xf32, #tpu.memory_space<vmem>>, vector<8x128xf32>
    tpu.vector_store %arg10[%c0_35, %c0_36], %34 {strides = array<i32>} : memref<8x128xf32, #tpu.memory_space<vmem>>, vector<8x128xf32>,
    return
  }
  func.func @transform_0(%arg0: i32, %arg1: memref<8xi32, #tpu.memory_space<smem>>) -> (i32, i32) {
    %c0_i32 = arith.constant 0 : i32
    %c0_i32_0 = arith.constant 0 : i32
    %c0_i32_1 = arith.constant 0 : i32
    return %c0_i32, %c0_i32_0 : i32, i32
  }
  func.func @transform_1(%arg0: i32, %arg1: memref<8xi32, #tpu.memory_space<smem>>) -> (i32, i32) {
    %c0_i32 = arith.constant 0 : i32
    %c0_i32_0 = arith.constant 0 : i32
    %c0_i32_1 = arith.constant 0 : i32
    return %c0_i32, %c0_i32_0 : i32, i32
  }
  func.func @transform_2(%arg0: i32, %arg1: memref<8xi32, #tpu.memory_space<smem>>) -> (i32, i32) {
    %c0_i32 = arith.constant 0 : i32
    %c0_i32_0 = arith.constant 0 : i32
    %c0_i32_1 = arith.constant 0 : i32
    return %c0_i32, %c0_i32_0 : i32, i32
  }
  func.func @transform_3(%arg0: i32, %arg1: memref<8xi32, #tpu.memory_space<smem>>) -> (i32, i32) {
    %c0_i32 = arith.constant 0 : i32
    %c0_i32_0 = arith.constant 0 : i32
    %c0_i32_1 = arith.constant 0 : i32
    return %c0_i32, %c0_i32_0 : i32, i32
  }
  func.func @transform_4(%arg0: i32, %arg1: memref<8xi32, #tpu.memory_space<smem>>) -> (i32, i32) {
    %c0_i32 = arith.constant 0 : i32
    %c0_i32_0 = arith.constant 0 : i32
    %c0_i32_1 = arith.constant 0 : i32
    return %c0_i32, %c0_i32_0 : i32, i32
  }
  func.func @transform_5(%arg0: i32, %arg1: memref<8xi32, #tpu.memory_space<smem>>) -> (i32, i32) {
    %c0_i32 = arith.constant 0 : i32
    %c0_i32_0 = arith.constant 0 : i32
    %c0_i32_1 = arith.constant 0 : i32
    return %c0_i32, %c0_i32_0 : i32, i32
  }
  func.func @transform_6(%arg0: i32, %arg1: memref<8xi32, #tpu.memory_space<smem>>) -> (i32, i32) {
    %c0_i32 = arith.constant 0 : i32
    %c0_i32_0 = arith.constant 0 : i32
    %c0_i32_1 = arith.constant 0 : i32
    return %c0_i32, %c0_i32_0 : i32, i32
  }
  func.func @transform_7(%arg0: i32, %arg1: memref<8xi32, #tpu.memory_space<smem>>) -> (i32, i32) {
    %c0_i32 = arith.constant 0 : i32
    %c0_i32_0 = arith.constant 0 : i32
    %c0_i32_1 = arith.constant 0 : i32
    return %c0_i32, %c0_i32_0 : i32, i32
  }
  func.func @transform_8(%arg0: i32, %arg1: memref<8xi32, #tpu.memory_space<smem>>) -> (i32, i32) {
    %c0_i32 = arith.constant 0 : i32
    %c0_i32_0 = arith.constant 0 : i32
    %c0_i32_1 = arith.constant 0 : i32
    return %c0_i32, %c0_i32_0 : i32, i32
  }
  func.func @transform_9(%arg0: i32, %arg1: memref<8xi32, #tpu.memory_space<smem>>) -> (i32, i32) {
    %c0_i32 = arith.constant 0 : i32
    %c0_i32_0 = arith.constant 0 : i32
    %c0_i32_1 = arith.constant 0 : i32
    return %c0_i32, %c0_i32_0 : i32, i32
  }
}

</mosaic_0001>

<llo_original>
// kernel: decoder_rnn_decode.1
$region0: #{decoder_rnn_decode.1}
  #allocation0 [shape = 'u32[]', space=smem, size = 0x4, offset = 0x4, fixed_abs, tag = 'smem constant byte address 0x4 - core index']
  #allocation1 [shape = 'u32[144,128]{1,0:T(1,128)}', space=vmem, size = 0x12000, scoped, tag = 'internal scratch']
  #allocation2 [shape = 'f32[8,128]{1,0:T(8,128)}', space=vmem, size = 0x1000, scoped, tag = 'scratch operand']
  #allocation3 [shape = 'f32[8,384]{1,0:T(8,128)}', space=vmem, size = 0x3000, scoped, tag = 'scratch operand']
  #allocation4 [shape = 'f32[1,128]{1,0:T(1,128)}', space=vmem, size = 0x200, scoped, tag = 'scratch operand']
  #allocation5 [shape = 'f32[8,128]{1,0:T(8,128)}', space=vmem, size = 0x1000, scoped, tag = 'scratch operand']
  #allocation6 [shape = 's32[1]{0}', space=sflag, size = 0x4, scoped, tag = 'scoped memory for decoder_rnn_decode.1']
  #allocation7 [shape = 'u8[512]{0}', space=smem, size = 0x200, scoped, tag = 'prefetched SMEM operand 0']
  %s0 = inlined_call_operand.vmem [shape: s32[8], index: 0, kind: input, shape index: {}]
  %s1 = inlined_call_operand.hbm [shape: f32[64,128], index: 1, kind: input, shape index: {}]
  %s2 = inlined_call_operand.vmem [shape: f32[1,128], index: 2, kind: input, shape index: {}]
  %s3 = inlined_call_operand.hbm [shape: bf16[128,384], index: 3, kind: input, shape index: {}]
  %s4 = inlined_call_operand.hbm [shape: bf16[128,384], index: 4, kind: input, shape index: {}]
  %s5 = inlined_call_operand.vmem [shape: f32[1,384], index: 5, kind: input, shape index: {}]
  %s6 = inlined_call_operand.vmem [shape: f32[1,384], index: 6, kind: input, shape index: {}]
  %s7 = inlined_call_operand.hbm [shape: bf16[128,128], index: 7, kind: input, shape index: {}]
  %s8 = inlined_call_operand.vmem [shape: f32[1,128], index: 8, kind: input, shape index: {}]
  %s9 = inlined_call_operand.hbm [shape: f32[8,128], index: 9, kind: output, shape index: {0}]
  %s10 = inlined_call_operand.vmem [shape: f32[1,128], index: 10, kind: output, shape index: {1}]
  %11 = xla_tuple %s9, %s10
  %s12 = sld [smem:[#allocation0]]
  $region80: #{decoder_rnn_decode.1} parent=0
    _
  %s14 = ssub.s32 1, %s12
  %s15 = scalar_select 0, %s14, %s12
  %s16 = sshll.u32 %s0, 4
  %s17 = int_to_ptr.vmem [resolvable:$true] %s16
  %19 = dma.vmem_to_smem %s17, 16, [#allocation7], [#allocation6]
  %20 = dma.done [#allocation6], 16
  %21 = sfence
  $region1: #{decoder_rnn_decode.1} parent=0
    #allocation8 [shape = 'u8[32768]{0}', space=vmem, size = 0x8000, scoped, tag = 'input window, operand 1, single buffered']
    #allocation9 [shape = 's32[1]{0}', space=sflag, size = 0x4, scoped, tag = 'scoped memory for decoder_rnn_decode.1']
    #allocation10 [shape = 's32[1]{0}', space=sflag, size = 0x4, scoped, tag = 'scoped memory for decoder_rnn_decode.1']
    #allocation11 [shape = 'u8[98304]{0}', space=vmem, size = 0x18000, scoped, tag = 'input window, operand 3, single buffered']
    #allocation12 [shape = 's32[1]{0}', space=sflag, size = 0x4, scoped, tag = 'scoped memory for decoder_rnn_decode.1']
    #allocation13 [shape = 'u8[98304]{0}', space=vmem, size = 0x18000, scoped, tag = 'input window, operand 4, single buffered']
    #allocation14 [shape = 'u8[32768]{0}', space=vmem, size = 0x8000, scoped, tag = 'input window, operand 7, single buffered']
    #allocation15 [shape = 's32[1]{0}', space=sflag, size = 0x4, scoped, tag = 'scoped memory for decoder_rnn_decode.1']
    #allocation16 [shape = 'u8[4096]{0}', space=vmem, size = 0x1000, scoped, tag = 'output window, operand 0, single buffered']
    %22 = vsyncpa [#allocation9], 0
    %23 = vsyncpa [#allocation12], 0
    %24 = vsyncpa [#allocation15], 0
    %25 = vsyncpa [#allocation10], 0
    // Predicated region
    $region2: #{decoder_rnn_decode.1} parent=1 // pred_check
      _
    $region3: #{decoder_rnn_decode.1} parent=1 // pred_check_branch
      %27 = sbr.rel (0) target = $region5
    $region4: #{decoder_rnn_decode.1} parent=1 // pred_region
      %s29 = ssub.s32 1024, 1024
      %30 = vsyncadd [#allocation9], %s29
      %s31 = sshll.u32 [#allocation8], 4
      %s32 = int_to_ptr.vmem [resolvable:$true] %s31
      %37 = dma.hbm_to_vmem [thread:$0]  %s1, 1024, %s32, [#allocation9], 128, 128, 8
    $region5: #{decoder_rnn_decode.1} parent=1 // pred_fallthru
      _
    // Predicated region
    $region6: #{decoder_rnn_decode.1} parent=1 // pred_check
      _
    $region7: #{decoder_rnn_decode.1} parent=1 // pred_check_branch
      %39 = sbr.rel (0) target = $region9
    $region8: #{decoder_rnn_decode.1} parent=1 // pred_region
      _
    $region9: #{decoder_rnn_decode.1} parent=1 // pred_fallthru
      _
    // Predicated region
    $region10: #{decoder_rnn_decode.1} parent=1 // pred_check
      _
    $region11: #{decoder_rnn_decode.1} parent=1 // pred_check_branch
      %41 = sbr.rel (0) target = $region13
    $region12: #{decoder_rnn_decode.1} parent=1 // pred_region
      %s43 = ssub.s32 3072, 3072
      %44 = vsyncadd [#allocation12], %s43
      %s45 = sshll.u32 [#allocation11], 4
      %s46 = int_to_ptr.vmem [resolvable:$true] %s45
      %51 = dma.hbm_to_vmem [thread:$0]  %s3, 3072, %s46, [#allocation12], 192, 192, 12
    $region13: #{decoder_rnn_decode.1} parent=1 // pred_fallthru
      _
    // Predicated region
    $region14: #{decoder_rnn_decode.1} parent=1 // pred_check
      _
    $region15: #{decoder_rnn_decode.1} parent=1 // pred_check_branch
      %53 = sbr.rel (0) target = $region17
    $region16: #{decoder_rnn_decode.1} parent=1 // pred_region
      %s55 = ssub.s32 3072, 3072
      %56 = vsyncadd [#allocation12], %s55
      %s57 = sshll.u32 [#allocation13], 4
      %s58 = int_to_ptr.vmem [resolvable:$true] %s57
      %63 = dma.hbm_to_vmem [thread:$0]  %s4, 3072, %s58, [#allocation12], 192, 192, 12
    $region17: #{decoder_rnn_decode.1} parent=1 // pred_fallthru
      _
    // Predicated region
    $region18: #{decoder_rnn_decode.1} parent=1 // pred_check
      _
    $region19: #{decoder_rnn_decode.1} parent=1 // pred_check_branch
      %65 = sbr.rel (0) target = $region21
    $region20: #{decoder_rnn_decode.1} parent=1 // pred_region
      _
    $region21: #{decoder_rnn_decode.1} parent=1 // pred_fallthru
      _
    // Predicated region
    $region22: #{decoder_rnn_decode.1} parent=1 // pred_check
      _
    $region23: #{decoder_rnn_decode.1} parent=1 // pred_check_branch
      %67 = sbr.rel (0) target = $region25
    $region24: #{decoder_rnn_decode.1} parent=1 // pred_region
      _
    $region25: #{decoder_rnn_decode.1} parent=1 // pred_fallthru
      _
    // Predicated region
    $region26: #{decoder_rnn_decode.1} parent=1 // pred_check
      _
    $region27: #{decoder_rnn_decode.1} parent=1 // pred_check_branch
      %69 = sbr.rel (0) target = $region29
    $region28: #{decoder_rnn_decode.1} parent=1 // pred_region
      %s71 = ssub.s32 1024, 1024
      %72 = vsyncadd [#allocation15], %s71
      %s73 = sshll.u32 [#allocation14], 4
      %s74 = int_to_ptr.vmem [resolvable:$true] %s73
      %79 = dma.hbm_to_vmem [thread:$0]  %s7, 1024, %s74, [#allocation15], 64, 64, 4
    $region29: #{decoder_rnn_decode.1} parent=1 // pred_fallthru
      _
    // Predicated region
    $region30: #{decoder_rnn_decode.1} parent=1 // pred_check
      _
    $region31: #{decoder_rnn_decode.1} parent=1 // pred_check_branch
      %81 = sbr.rel (0) target = $region33
    $region32: #{decoder_rnn_decode.1} parent=1 // pred_region
      _
    $region33: #{decoder_rnn_decode.1} parent=1 // pred_fallthru
      _
    // Predicated region
    $region34: #{decoder_rnn_decode.1} parent=1 // pred_check
      _
    $region35: #{decoder_rnn_decode.1} parent=1 // pred_check_branch
      %83 = sbr.rel (0) target = $region37
    $region36: #{decoder_rnn_decode.1} parent=1 // pred_region
      %84 = dma.done [#allocation9], 1024
    $region37: #{decoder_rnn_decode.1} parent=1 // pred_fallthru
      _
    // Predicated region
    $region38: #{decoder_rnn_decode.1} parent=1 // pred_check
      _
    $region39: #{decoder_rnn_decode.1} parent=1 // pred_check_branch
      %86 = sbr.rel (0) target = $region41
    $region40: #{decoder_rnn_decode.1} parent=1 // pred_region
      %87 = dma.done [#allocation12], 3072
    $region41: #{decoder_rnn_decode.1} parent=1 // pred_fallthru
      _
    // Predicated region
    $region42: #{decoder_rnn_decode.1} parent=1 // pred_check
      _
    $region43: #{decoder_rnn_decode.1} parent=1 // pred_check_branch
      %89 = sbr.rel (0) target = $region45
    $region44: #{decoder_rnn_decode.1} parent=1 // pred_region
      %90 = dma.done [#allocation12], 3072
    $region45: #{decoder_rnn_decode.1} parent=1 // pred_fallthru
      _
    // Predicated region
    $region46: #{decoder_rnn_decode.1} parent=1 // pred_check
      _
    $region47: #{decoder_rnn_decode.1} parent=1 // pred_check_branch
      %92 = sbr.rel (0) target = $region49
    $region48: #{decoder_rnn_decode.1} parent=1 // pred_region
      %93 = dma.done [#allocation15], 1024
    $region49: #{decoder_rnn_decode.1} parent=1 // pred_fallthru
      _
    %v95 = vld [vmem:[%s2] sm:$0x1]
    %96 = vst [vmem:[#allocation4] sm:$0x1] %v95
    %97 = vst [vmem:[#allocation2] sm:$0xff] 0.0
    %98 = vst [vmem:[#allocation5] sm:$0xff] 0.0
    loop: start=0, step=1, limit=8
    $region50: #{decoder_rnn_decode.1} parent=1 // loop_pre_header
      _
    $region51: #{decoder_rnn_decode.1} parent=1 // loop_header
      %s100 = sphi 0, %s104
      %p101 = scmp.ge.s32.totalorder %s100, 8
    $region52: #{decoder_rnn_decode.1} parent=1 // loop_header_branch
      %103 = sbr.rel (%p101) target = $region56
    $region53: #{decoder_rnn_decode.1} parent=1 // loop_body
      %s105 = sld [smem:[#allocation7 + %s100]]
      %s106 = scalar_lea.vmem [#allocation8], %s105
      %v107 = vld [vmem:[%s106] sm:$0x1]
      %v108 = vmax.f32 %v107, 0.0
      %s109 = scalar_lea.vmem [#allocation2], %s100
      %110 = vst [vmem:[%s109] sm:$0x1] %v108
    $region54: #{decoder_rnn_decode.1} parent=1 // loop_footer
      %s104 = sadd.s32 1, %s100
    $region55: #{decoder_rnn_decode.1} parent=1 // loop_footer_branch
      %99 = sbr.rel target = $region51
    $region56: #{decoder_rnn_decode.1} parent=1 // loop_exit
      _
    %v111 = vld [vmem:[#allocation2] sm:$0xff]
    %v112 = vpack.c.bf16 %v111, %v111
    %v113 = vld [vmem:[#allocation11] sm:$0xff]
    %v114 = vld [vmem:[#allocation11 + $0x8] sm:$0xf]
    %v115 = vld [vmem:[#allocation11 + $0xc] sm:$0xff]
    %v116 = vld [vmem:[#allocation11 + $0x14] sm:$0xf]
    %v117 = vld [vmem:[#allocation11 + $0x18] sm:$0xff]
    %v118 = vld [vmem:[#allocation11 + $0x20] sm:$0xf]
    %v119 = vld [vmem:[#allocation11 + $0x24] sm:$0xff]
    %v120 = vld [vmem:[#allocation11 + $0x2c] sm:$0xf]
    %v121 = vld [vmem:[#allocation11 + $0x30] sm:$0xff]
    %v122 = vld [vmem:[#allocation11 + $0x38] sm:$0xf]
    %v123 = vld [vmem:[#allocation11 + $0x3c] sm:$0xff]
    %v124 = vld [vmem:[#allocation11 + $0x44] sm:$0xf]
    %v125 = vld [vmem:[#allocation11 + $0x48] sm:$0xff]
    %v126 = vld [vmem:[#allocation11 + $0x50] sm:$0xf]
    %v127 = vld [vmem:[#allocation11 + $0x54] sm:$0xff]
    %v128 = vld [vmem:[#allocation11 + $0x5c] sm:$0xf]
    %v129 = vld [vmem:[#allocation11 + $0x60] sm:$0xff]
    %v130 = vld [vmem:[#allocation11 + $0x68] sm:$0xf]
    %v131 = vld [vmem:[#allocation11 + $0x6c] sm:$0xff]
    %v132 = vld [vmem:[#allocation11 + $0x74] sm:$0xf]
    %v133 = vld [vmem:[#allocation11 + $0x78] sm:$0xff]
    %v134 = vld [vmem:[#allocation11 + $0x80] sm:$0xf]
    %v135 = vld [vmem:[#allocation11 + $0x84] sm:$0xff]
    %v136 = vld [vmem:[#allocation11 + $0x8c] sm:$0xf]
    %v137 = vld [vmem:[#allocation11 + $0x90] sm:$0xff]
    %v138 = vld [vmem:[#allocation11 + $0x98] sm:$0xf]
    %v139 = vld [vmem:[#allocation11 + $0x9c] sm:$0xff]
    %v140 = vld [vmem:[#allocation11 + $0xa4] sm:$0xf]
    %v141 = vld [vmem:[#allocation11 + $0xa8] sm:$0xff]
    %v142 = vld [vmem:[#allocation11 + $0xb0] sm:$0xf]
    %v143 = vld [vmem:[#allocation11 + $0xb4] sm:$0xff]
    %v144 = vld [vmem:[#allocation11 + $0xbc] sm:$0xf]
    %v145 = vld [vmem:[%s5] sm:$0x7]
    %v147 = vlaneseq
    %v148 = vshrl.u32 %v147, 7
    %v149 = vsub.s32 0, %v148
    %v150 = vrot.slane %v145, %v149
    %v151 = vlaneseq
    %v152 = vshrl.u32 %v151, 7
    %v153 = vsub.s32 1, %v152
    %v154 = vrot.slane %v145, %v153
    %v155 = vlaneseq
    %v156 = vshrl.u32 %v155, 7
    %v157 = vsub.s32 2, %v156
    %v158 = vrot.slane %v145, %v157
    %v194 = vunpack.c.l.b16 %v113
    %v195 = vunpack.c.h.b16 %v113
    %v196 = vunpack.c.l.b16 %v114
    %v197 = vunpack.c.l.b16 %v115
    %v198 = vunpack.c.h.b16 %v115
    %v199 = vunpack.c.l.b16 %v116
    %v200 = vunpack.c.l.b16 %v117
    %v201 = vunpack.c.h.b16 %v117
    %v202 = vunpack.c.l.b16 %v118
    %v203 = vunpack.c.l.b16 %v119
    %v204 = vunpack.c.h.b16 %v119
    %v205 = vunpack.c.l.b16 %v120
    %v206 = vunpack.c.l.b16 %v121
    %v207 = vunpack.c.h.b16 %v121
    %v208 = vunpack.c.l.b16 %v122
    %v209 = vunpack.c.l.b16 %v123
    %v210 = vunpack.c.h.b16 %v123
    %v211 = vunpack.c.l.b16 %v124
    %v212 = vunpack.c.l.b16 %v125
    %v213 = vunpack.c.h.b16 %v125
    %v214 = vunpack.c.l.b16 %v126
    %v215 = vunpack.c.l.b16 %v127
    %v216 = vunpack.c.h.b16 %v127
    %v217 = vunpack.c.l.b16 %v128
    %v218 = vunpack.c.l.b16 %v129
    %v219 = vunpack.c.h.b16 %v129
    %v220 = vunpack.c.l.b16 %v130
    %v221 = vunpack.c.l.b16 %v131
    %v222 = vunpack.c.h.b16 %v131
    %v223 = vunpack.c.l.b16 %v132
    %v224 = vunpack.c.l.b16 %v133
    %v225 = vunpack.c.h.b16 %v133
    %v226 = vunpack.c.l.b16 %v134
    %v227 = vunpack.c.l.b16 %v135
    %v228 = vunpack.c.h.b16 %v135
    %v229 = vunpack.c.l.b16 %v136
    %v230 = vunpack.c.l.b16 %v137
    %v231 = vunpack.c.h.b16 %v137
    %v232 = vunpack.c.l.b16 %v138
    %v233 = vunpack.c.l.b16 %v139
    %v234 = vunpack.c.h.b16 %v139
    %v235 = vunpack.c.l.b16 %v140
    %v236 = vunpack.c.l.b16 %v141
    %v237 = vunpack.c.h.b16 %v141
    %v238 = vunpack.c.l.b16 %v142
    %v239 = vunpack.c.l.b16 %v143
    %v240 = vunpack.c.h.b16 %v143
    %v241 = vunpack.c.l.b16 %v144
    %v242 = vpack.c.b16 %v197, %v194
    %v243 = vpack.c.b16 %v198, %v195
    %v244 = vpack.c.b16 %v199, %v196
    %v245 = vpack.c.b16 %v203, %v200
    %v246 = vpack.c.b16 %v204, %v201
    %v247 = vpack.c.b16 %v205, %v202
    %v248 = vpack.c.b16 %v209, %v206
    %v249 = vpack.c.b16 %v210, %v207
    %v250 = vpack.c.b16 %v211, %v208
    %v251 = vpack.c.b16 %v215, %v212
    %v252 = vpack.c.b16 %v216, %v213
    %v253 = vpack.c.b16 %v217, %v214
    %v254 = vpack.c.b16 %v221, %v218
    %v255 = vpack.c.b16 %v222, %v219
    %v256 = vpack.c.b16 %v223, %v220
    %v257 = vpack.c.b16 %v227, %v224
    %v258 = vpack.c.b16 %v228, %v225
    %v259 = vpack.c.b16 %v229, %v226
    %v260 = vpack.c.b16 %v233, %v230
    %v261 = vpack.c.b16 %v234, %v231
    %v262 = vpack.c.b16 %v235, %v232
    %v263 = vpack.c.b16 %v239, %v236
    %v264 = vpack.c.b16 %v240, %v237
    %v265 = vpack.c.b16 %v241, %v238
    %290 = vmatprep.subr.bf16.mxu0 %v264
    %291 = vmatpush1.bf16.msra.mxu0 %v263
    %292 = vmatprep.subr.bf16.mxu0 %v261
    %293 = vmatpush1.bf16.msra.mxu0 %v260
    %294 = vmatprep.subr.bf16.mxu0 %v258
    %295 = vmatpush1.bf16.msra.mxu0 %v257
    %296 = vmatprep.subr.bf16.mxu0 %v255
    %297 = vmatpush1.bf16.msra.mxu0 %v254
    %298 = vmatprep.subr.bf16.mxu0 %v252
    %299 = vmatpush1.bf16.msra.mxu0 %v251
    %300 = vmatprep.subr.bf16.mxu0 %v249
    %301 = vmatpush1.bf16.msra.mxu0 %v248
    %302 = vmatprep.subr.bf16.mxu0 %v246
    %303 = vmatpush1.bf16.msra.mxu0 %v245
    %304 = vmatprep.subr.bf16.mxu0 %v243
    %305 = vmatpush1.bf16.msra.mxu0 %v242
    %306 = vmatprep.subr.bf16.mxu0 0
    %307 = vmatpush2.bf16.msra.mxu0 0
    %308 = vmatprep.subr.bf16.mxu0 0
    %309 = vmatpush2.bf16.msra.mxu0 0
    %310 = vmatprep.subr.bf16.mxu0 0
    %311 = vmatpush2.bf16.msra.mxu0 0
    %312 = vmatprep.subr.bf16.mxu0 0
    %313 = vmatpush2.bf16.msra.mxu0 0
    %314 = vmatprep.subr.bf16.mxu0 0
    %315 = vmatpush2.bf16.msra.mxu0 0
    %316 = vmatprep.subr.bf16.mxu0 0
    %317 = vmatpush2.bf16.msra.mxu0 0
    %318 = vmatprep.subr.bf16.mxu0 0
    %319 = vmatpush2.bf16.msra.mxu0 0
    %320 = vmatprep.subr.bf16.mxu0 0
    %321 = vmatpush2.bf16.msra.mxu0 0
    %322 = vmatprep.mubr.bf16.mxu0 0
    %323 = vmatmul.mubr.bf16.gmra.mxu0 %v112
    %v324 = vpop.f32.mrf.mxu0
    %v325 = vadd.f32 %v150, %v324
    %v326 = vpop.f32.mrf.mxu0
    %v327 = vadd.f32 %v154, %v326
    %v328 = vpop.f32.mrf.mxu0
    %v329 = vpop.f32.mrf.mxu0
    %330 = vdwg.mxu0
    %331 = vmatprep.subr.bf16.mxu0 0
    %332 = vmatpush1.bf16.msra.mxu0 %v265
    %333 = vmatprep.subr.bf16.mxu0 0
    %334 = vmatpush1.bf16.msra.mxu0 %v262
    %335 = vmatprep.subr.bf16.mxu0 0
    %336 = vmatpush1.bf16.msra.mxu0 %v259
    %337 = vmatprep.subr.bf16.mxu0 0
    %338 = vmatpush1.bf16.msra.mxu0 %v256
    %339 = vmatprep.subr.bf16.mxu0 0
    %340 = vmatpush1.bf16.msra.mxu0 %v253
    %341 = vmatprep.subr.bf16.mxu0 0
    %342 = vmatpush1.bf16.msra.mxu0 %v250
    %343 = vmatprep.subr.bf16.mxu0 0
    %344 = vmatpush1.bf16.msra.mxu0 %v247
    %345 = vmatprep.subr.bf16.mxu0 0
    %346 = vmatpush1.bf16.msra.mxu0 %v244
    %347 = vmatprep.subr.bf16.mxu0 0
    %348 = vmatpush2.bf16.msra.mxu0 0
    %349 = vmatprep.subr.bf16.mxu0 0
    %350 = vmatpush2.bf16.msra.mxu0 0
    %351 = vmatprep.subr.bf16.mxu0 0
    %352 = vmatpush2.bf16.msra.mxu0 0
    %353 = vmatprep.subr.bf16.mxu0 0
    %354 = vmatpush2.bf16.msra.mxu0 0
    %355 = vmatprep.subr.bf16.mxu0 0
    %356 = vmatpush2.bf16.msra.mxu0 0
    %357 = vmatprep.subr.bf16.mxu0 0
    %358 = vmatpush2.bf16.msra.mxu0 0
    %359 = vmatprep.subr.bf16.mxu0 0
    %360 = vmatpush2.bf16.msra.mxu0 0
    %361 = vmatprep.subr.bf16.mxu0 0
    %362 = vmatpush2.bf16.msra.mxu0 0
    %363 = vmatprep.mubr.bf16.mxu0 0
    %364 = vmatmul.mubr.bf16.gmra.mxu0 %v112
    %v365 = vpop.f32.mrf.mxu0
    %v366 = vadd.f32 %v158, %v365
    %v367 = vpop.f32.mrf.mxu0
    %v368 = vpop.f32.mrf.mxu0
    %v369 = vpop.f32.mrf.mxu0
    %370 = vdwg.mxu0
    %371 = vst [vmem:[#allocation3] sm:$0xff] %v325
    %372 = vst [vmem:[#allocation3 + $0x8] sm:$0xff] %v327
    %373 = vst [vmem:[#allocation3 + $0x10] sm:$0xff] %v366
    loop: start=0, step=1, limit=8
    $region57: #{decoder_rnn_decode.1} parent=1 // loop_pre_header
      _
    $region58: #{decoder_rnn_decode.1} parent=1 // loop_header
      %s375 = sphi 0, %s379
      %p376 = scmp.ge.s32.totalorder %s375, 8
    $region59: #{decoder_rnn_decode.1} parent=1 // loop_header_branch
      %378 = sbr.rel (%p376) target = $region63
    $region60: #{decoder_rnn_decode.1} parent=1 // loop_body
      %v380 = vld [vmem:[#allocation4] sm:$0x1]
      %v381 = vpack.c.bf16 %v380, %v380
      %v382 = vld [vmem:[#allocation13] sm:$0xff]
      %v383 = vld [vmem:[#allocation13 + $0x8] sm:$0xf]
      %v384 = vld [vmem:[#allocation13 + $0xc] sm:$0xff]
      %v385 = vld [vmem:[#allocation13 + $0x14] sm:$0xf]
      %v386 = vld [vmem:[#allocation13 + $0x18] sm:$0xff]
      %v387 = vld [vmem:[#allocation13 + $0x20] sm:$0xf]
      %v388 = vld [vmem:[#allocation13 + $0x24] sm:$0xff]
      %v389 = vld [vmem:[#allocation13 + $0x2c] sm:$0xf]
      %v390 = vld [vmem:[#allocation13 + $0x30] sm:$0xff]
      %v391 = vld [vmem:[#allocation13 + $0x38] sm:$0xf]
      %v392 = vld [vmem:[#allocation13 + $0x3c] sm:$0xff]
      %v393 = vld [vmem:[#allocation13 + $0x44] sm:$0xf]
      %v394 = vld [vmem:[#allocation13 + $0x48] sm:$0xff]
      %v395 = vld [vmem:[#allocation13 + $0x50] sm:$0xf]
      %v396 = vld [vmem:[#allocation13 + $0x54] sm:$0xff]
      %v397 = vld [vmem:[#allocation13 + $0x5c] sm:$0xf]
      %v398 = vld [vmem:[#allocation13 + $0x60] sm:$0xff]
      %v399 = vld [vmem:[#allocation13 + $0x68] sm:$0xf]
      %v400 = vld [vmem:[#allocation13 + $0x6c] sm:$0xff]
      %v401 = vld [vmem:[#allocation13 + $0x74] sm:$0xf]
      %v402 = vld [vmem:[#allocation13 + $0x78] sm:$0xff]
      %v403 = vld [vmem:[#allocation13 + $0x80] sm:$0xf]
      %v404 = vld [vmem:[#allocation13 + $0x84] sm:$0xff]
      %v405 = vld [vmem:[#allocation13 + $0x8c] sm:$0xf]
      %v406 = vld [vmem:[#allocation13 + $0x90] sm:$0xff]
      %v407 = vld [vmem:[#allocation13 + $0x98] sm:$0xf]
      %v408 = vld [vmem:[#allocation13 + $0x9c] sm:$0xff]
      %v409 = vld [vmem:[#allocation13 + $0xa4] sm:$0xf]
      %v410 = vld [vmem:[#allocation13 + $0xa8] sm:$0xff]
      %v411 = vld [vmem:[#allocation13 + $0xb0] sm:$0xf]
      %v412 = vld [vmem:[#allocation13 + $0xb4] sm:$0xff]
      %v413 = vld [vmem:[#allocation13 + $0xbc] sm:$0xf]
      %v414 = vld [vmem:[%s6] sm:$0x7]
      %v447 = vunpack.c.l.b16 %v382
      %v448 = vunpack.c.h.b16 %v382
      %v449 = vunpack.c.l.b16 %v383
      %v450 = vunpack.c.l.b16 %v384
      %v451 = vunpack.c.h.b16 %v384
      %v452 = vunpack.c.l.b16 %v385
      %v453 = vunpack.c.l.b16 %v386
      %v454 = vunpack.c.h.b16 %v386
      %v455 = vunpack.c.l.b16 %v387
      %v456 = vunpack.c.l.b16 %v388
      %v457 = vunpack.c.h.b16 %v388
      %v458 = vunpack.c.l.b16 %v389
      %v459 = vunpack.c.l.b16 %v390
      %v460 = vunpack.c.h.b16 %v390
      %v461 = vunpack.c.l.b16 %v391
      %v462 = vunpack.c.l.b16 %v392
      %v463 = vunpack.c.h.b16 %v392
      %v464 = vunpack.c.l.b16 %v393
      %v465 = vunpack.c.l.b16 %v394
      %v466 = vunpack.c.h.b16 %v394
      %v467 = vunpack.c.l.b16 %v395
      %v468 = vunpack.c.l.b16 %v396
      %v469 = vunpack.c.h.b16 %v396
      %v470 = vunpack.c.l.b16 %v397
      %v471 = vunpack.c.l.b16 %v398
      %v472 = vunpack.c.h.b16 %v398
      %v473 = vunpack.c.l.b16 %v399
      %v474 = vunpack.c.l.b16 %v400
      %v475 = vunpack.c.h.b16 %v400
      %v476 = vunpack.c.l.b16 %v401
      %v477 = vunpack.c.l.b16 %v402
      %v478 = vunpack.c.h.b16 %v402
      %v479 = vunpack.c.l.b16 %v403
      %v480 = vunpack.c.l.b16 %v404
      %v481 = vunpack.c.h.b16 %v404
      %v482 = vunpack.c.l.b16 %v405
      %v483 = vunpack.c.l.b16 %v406
      %v484 = vunpack.c.h.b16 %v406
      %v485 = vunpack.c.l.b16 %v407
      %v486 = vunpack.c.l.b16 %v408
      %v487 = vunpack.c.h.b16 %v408
      %v488 = vunpack.c.l.b16 %v409
      %v489 = vunpack.c.l.b16 %v410
      %v490 = vunpack.c.h.b16 %v410
      %v491 = vunpack.c.l.b16 %v411
      %v492 = vunpack.c.l.b16 %v412
      %v493 = vunpack.c.h.b16 %v412
      %v494 = vunpack.c.l.b16 %v413
      %v495 = vpack.c.b16 %v450, %v447
      %v496 = vpack.c.b16 %v451, %v448
      %v497 = vpack.c.b16 %v452, %v449
      %v498 = vpack.c.b16 %v456, %v453
      %v499 = vpack.c.b16 %v457, %v454
      %v500 = vpack.c.b16 %v458, %v455
      %v501 = vpack.c.b16 %v462, %v459
      %v502 = vpack.c.b16 %v463, %v460
      %v503 = vpack.c.b16 %v464, %v461
      %v504 = vpack.c.b16 %v468, %v465
      %v505 = vpack.c.b16 %v469, %v466
      %v506 = vpack.c.b16 %v470, %v467
      %v507 = vpack.c.b16 %v474, %v471
      %v508 = vpack.c.b16 %v475, %v472
      %v509 = vpack.c.b16 %v476, %v473
      %v510 = vpack.c.b16 %v480, %v477
      %v511 = vpack.c.b16 %v481, %v478
      %v512 = vpack.c.b16 %v482, %v479
      %v513 = vpack.c.b16 %v486, %v483
      %v514 = vpack.c.b16 %v487, %v484
      %v515 = vpack.c.b16 %v488, %v485
      %v516 = vpack.c.b16 %v492, %v489
      %v517 = vpack.c.b16 %v493, %v490
      %v518 = vpack.c.b16 %v494, %v491
      %v544 = vlaneseq
      %v545 = vshrl.u32 %v544, 7
      %v546 = vsub.s32 0, %v545
      %v547 = vrot.slane %v414, %v546
      %v548 = vlaneseq
      %v549 = vshrl.u32 %v548, 7
      %v550 = vsub.s32 1, %v549
      %v551 = vrot.slane %v414, %v550
      %v552 = vlaneseq
      %v553 = vshrl.u32 %v552, 7
      %v554 = vsub.s32 2, %v553
      %v555 = vrot.slane %v414, %v554
      %559 = vmatprep.subr.bf16.mxu0 %v517
      %560 = vmatpush1.bf16.msra.mxu0 %v516
      %561 = vmatprep.subr.bf16.mxu0 %v514
      %562 = vmatpush1.bf16.msra.mxu0 %v513
      %563 = vmatprep.subr.bf16.mxu0 %v511
      %564 = vmatpush1.bf16.msra.mxu0 %v510
      %565 = vmatprep.subr.bf16.mxu0 %v508
      %566 = vmatpush1.bf16.msra.mxu0 %v507
      %567 = vmatprep.subr.bf16.mxu0 %v505
      %568 = vmatpush1.bf16.msra.mxu0 %v504
      %569 = vmatprep.subr.bf16.mxu0 %v502
      %570 = vmatpush1.bf16.msra.mxu0 %v501
      %571 = vmatprep.subr.bf16.mxu0 %v499
      %572 = vmatpush1.bf16.msra.mxu0 %v498
      %573 = vmatprep.subr.bf16.mxu0 %v496
      %574 = vmatpush1.bf16.msra.mxu0 %v495
      %575 = vmatprep.subr.bf16.mxu0 0
      %576 = vmatpush2.bf16.msra.mxu0 0
      %577 = vmatprep.subr.bf16.mxu0 0
      %578 = vmatpush2.bf16.msra.mxu0 0
      %579 = vmatprep.subr.bf16.mxu0 0
      %580 = vmatpush2.bf16.msra.mxu0 0
      %581 = vmatprep.subr.bf16.mxu0 0
      %582 = vmatpush2.bf16.msra.mxu0 0
      %583 = vmatprep.subr.bf16.mxu0 0
      %584 = vmatpush2.bf16.msra.mxu0 0
      %585 = vmatprep.subr.bf16.mxu0 0
      %586 = vmatpush2.bf16.msra.mxu0 0
      %587 = vmatprep.subr.bf16.mxu0 0
      %588 = vmatpush2.bf16.msra.mxu0 0
      %589 = vmatprep.subr.bf16.mxu0 0
      %590 = vmatpush2.bf16.msra.mxu0 0
      %591 = vmatprep.mubr.bf16.mxu0 0
      %592 = vmatmul.mubr.bf16.gmra.mxu0 %v381
      %v593 = vpop.f32.mrf.mxu0
      %v594 = vadd.f32 %v547, %v593
      %v595 = vpop.f32.mrf.mxu0
      %v596 = vadd.f32 %v551, %v595
      %v597 = vpop.f32.mrf.mxu0
      %v598 = vpop.f32.mrf.mxu0
      %599 = vdwg.mxu0
      %600 = vmatprep.subr.bf16.mxu0 0
      %601 = vmatpush1.bf16.msra.mxu0 %v518
      %602 = vmatprep.subr.bf16.mxu0 0
      %603 = vmatpush1.bf16.msra.mxu0 %v515
      %604 = vmatprep.subr.bf16.mxu0 0
      %605 = vmatpush1.bf16.msra.mxu0 %v512
      %606 = vmatprep.subr.bf16.mxu0 0
      %607 = vmatpush1.bf16.msra.mxu0 %v509
      %608 = vmatprep.subr.bf16.mxu0 0
      %609 = vmatpush1.bf16.msra.mxu0 %v506
      %610 = vmatprep.subr.bf16.mxu0 0
      %611 = vmatpush1.bf16.msra.mxu0 %v503
      %612 = vmatprep.subr.bf16.mxu0 0
      %613 = vmatpush1.bf16.msra.mxu0 %v500
      %614 = vmatprep.subr.bf16.mxu0 0
      %615 = vmatpush1.bf16.msra.mxu0 %v497
      %616 = vmatprep.subr.bf16.mxu0 0
      %617 = vmatpush2.bf16.msra.mxu0 0
      %618 = vmatprep.subr.bf16.mxu0 0
      %619 = vmatpush2.bf16.msra.mxu0 0
      %620 = vmatprep.subr.bf16.mxu0 0
      %621 = vmatpush2.bf16.msra.mxu0 0
      %622 = vmatprep.subr.bf16.mxu0 0
      %623 = vmatpush2.bf16.msra.mxu0 0
      %624 = vmatprep.subr.bf16.mxu0 0
      %625 = vmatpush2.bf16.msra.mxu0 0
      %626 = vmatprep.subr.bf16.mxu0 0
      %627 = vmatpush2.bf16.msra.mxu0 0
      %628 = vmatprep.subr.bf16.mxu0 0
      %629 = vmatpush2.bf16.msra.mxu0 0
      %630 = vmatprep.subr.bf16.mxu0 0
      %631 = vmatpush2.bf16.msra.mxu0 0
      %632 = vmatprep.mubr.bf16.mxu0 0
      %633 = vmatmul.mubr.bf16.gmra.mxu0 %v381
      %v634 = vpop.f32.mrf.mxu0
      %v635 = vadd.f32 %v555, %v634
      %v636 = vpop.f32.mrf.mxu0
      %v637 = vpop.f32.mrf.mxu0
      %v638 = vpop.f32.mrf.mxu0
      %639 = vdwg.mxu0
      %s640 = sshra.s32 %s375, 3
      %s641 = sand.u32 %s375, 7
      %s642 = sshra.s32 %s375, 3
      %s643 = sand.u32 %s375, 7
      %s644 = smul.u32 %s640, 3
      %s645 = smul.u32 %s644, 8
      %s646 = sadd.s32 %s645, %s643
      %s647 = scalar_lea.vmem [#allocation3], %s646
      %v648 = vld [vmem:[%s647] ss:$8 sm:$0x7]
      %v649 = vadd.f32 %v648, %v594
      %v650 = vxor.u32 %v649, 2147483648
      %v651 = vmul.f32 %v650, 1.442695
      %v652 = vpow.pop %v651
      %v653 = vadd.f32 %v652, 1.0
      %v654 = vrcp.pop %v653
      %v655 = vmul.f32 1.0, %v654
      %v657 = vrot.slane %v648, 1
      %v659 = vadd.f32 %v657, %v596
      %v660 = vxor.u32 %v659, 2147483648
      %v661 = vmul.f32 %v660, 1.442695
      %v662 = vpow.pop %v661
      %v663 = vadd.f32 %v662, 1.0
      %v664 = vrcp.pop %v663
      %v665 = vmul.f32 1.0, %v664
      %v666 = vmul.f32 %v655, %v635
      %v667 = vrot.slane %v648, 2
      %v669 = vadd.f32 %v667, %v666
      %v670 = vtanh.pop %v669
      %v671 = vsub.f32 1.0, %v665
      %v672 = vmul.f32 %v671, %v670
      %v673 = vmul.f32 %v665, %v380
      %v674 = vadd.f32 %v672, %v673
      %675 = vst [vmem:[#allocation4] sm:$0x1] %v674
      %s676 = scalar_lea.vmem [#allocation5], %s375
      %677 = vst [vmem:[%s676] sm:$0x1] %v674
    $region61: #{decoder_rnn_decode.1} parent=1 // loop_footer
      %s379 = sadd.s32 1, %s375
    $region62: #{decoder_rnn_decode.1} parent=1 // loop_footer_branch
      %374 = sbr.rel target = $region58
    $region63: #{decoder_rnn_decode.1} parent=1 // loop_exit
      _
    %v678 = vld [vmem:[#allocation4] sm:$0x1]
    %679 = vst [vmem:[%s10] sm:$0x1] %v678
    %v680 = vld [vmem:[#allocation5] sm:$0xff]
    %v681 = vpack.c.bf16 %v680, %v680
    %v682 = vld [vmem:[#allocation14] sm:$0xf]
    %v683 = vld [vmem:[#allocation14 + $0x4] sm:$0xf]
    %v684 = vld [vmem:[#allocation14 + $0x8] sm:$0xf]
    %v685 = vld [vmem:[#allocation14 + $0xc] sm:$0xf]
    %v686 = vld [vmem:[#allocation14 + $0x10] sm:$0xf]
    %v687 = vld [vmem:[#allocation14 + $0x14] sm:$0xf]
    %v688 = vld [vmem:[#allocation14 + $0x18] sm:$0xf]
    %v689 = vld [vmem:[#allocation14 + $0x1c] sm:$0xf]
    %v690 = vld [vmem:[#allocation14 + $0x20] sm:$0xf]
    %v691 = vld [vmem:[#allocation14 + $0x24] sm:$0xf]
    %v692 = vld [vmem:[#allocation14 + $0x28] sm:$0xf]
    %v693 = vld [vmem:[#allocation14 + $0x2c] sm:$0xf]
    %v694 = vld [vmem:[#allocation14 + $0x30] sm:$0xf]
    %v695 = vld [vmem:[#allocation14 + $0x34] sm:$0xf]
    %v696 = vld [vmem:[#allocation14 + $0x38] sm:$0xf]
    %v697 = vld [vmem:[#allocation14 + $0x3c] sm:$0xf]
    %v698 = vld [vmem:[%s8] sm:$0x1]
    %v700 = vlaneseq
    %v701 = vshrl.u32 %v700, 7
    %v702 = vsub.s32 0, %v701
    %v703 = vrot.slane %v698, %v702
    %v721 = vunpack.c.l.b16 %v682
    %v722 = vunpack.c.l.b16 %v683
    %v723 = vunpack.c.l.b16 %v684
    %v724 = vunpack.c.l.b16 %v685
    %v725 = vunpack.c.l.b16 %v686
    %v726 = vunpack.c.l.b16 %v687
    %v727 = vunpack.c.l.b16 %v688
    %v728 = vunpack.c.l.b16 %v689
    %v729 = vunpack.c.l.b16 %v690
    %v730 = vunpack.c.l.b16 %v691
    %v731 = vunpack.c.l.b16 %v692
    %v732 = vunpack.c.l.b16 %v693
    %v733 = vunpack.c.l.b16 %v694
    %v734 = vunpack.c.l.b16 %v695
    %v735 = vunpack.c.l.b16 %v696
    %v736 = vunpack.c.l.b16 %v697
    %v737 = vpack.c.b16 %v722, %v721
    %v738 = vpack.c.b16 %v724, %v723
    %v739 = vpack.c.b16 %v726, %v725
    %v740 = vpack.c.b16 %v728, %v727
    %v741 = vpack.c.b16 %v730, %v729
    %v742 = vpack.c.b16 %v732, %v731
    %v743 = vpack.c.b16 %v734, %v733
    %v744 = vpack.c.b16 %v736, %v735
    %753 = vmatprep.subr.bf16.mxu0 0
    %754 = vmatpush1.bf16.msra.mxu0 %v744
    %755 = vmatprep.subr.bf16.mxu0 0
    %756 = vmatpush1.bf16.msra.mxu0 %v743
    %757 = vmatprep.subr.bf16.mxu0 0
    %758 = vmatpush1.bf16.msra.mxu0 %v742
    %759 = vmatprep.subr.bf16.mxu0 0
    %760 = vmatpush1.bf16.msra.mxu0 %v741
    %761 = vmatprep.subr.bf16.mxu0 0
    %762 = vmatpush1.bf16.msra.mxu0 %v740
    %763 = vmatprep.subr.bf16.mxu0 0
    %764 = vmatpush1.bf16.msra.mxu0 %v739
    %765 = vmatprep.subr.bf16.mxu0 0
    %766 = vmatpush1.bf16.msra.mxu0 %v738
    %767 = vmatprep.subr.bf16.mxu0 0
    %768 = vmatpush1.bf16.msra.mxu0 %v737
    %769 = vmatprep.subr.bf16.mxu0 0
    %770 = vmatpush2.bf16.msra.mxu0 0
    %771 = vmatprep.subr.bf16.mxu0 0
    %772 = vmatpush2.bf16.msra.mxu0 0
    %773 = vmatprep.subr.bf16.mxu0 0
    %774 = vmatpush2.bf16.msra.mxu0 0
    %775 = vmatprep.subr.bf16.mxu0 0
    %776 = vmatpush2.bf16.msra.mxu0 0
    %777 = vmatprep.subr.bf16.mxu0 0
    %778 = vmatpush2.bf16.msra.mxu0 0
    %779 = vmatprep.subr.bf16.mxu0 0
    %780 = vmatpush2.bf16.msra.mxu0 0
    %781 = vmatprep.subr.bf16.mxu0 0
    %782 = vmatpush2.bf16.msra.mxu0 0
    %783 = vmatprep.subr.bf16.mxu0 0
    %784 = vmatpush2.bf16.msra.mxu0 0
    %785 = vmatprep.mubr.bf16.mxu0 0
    %786 = vmatmul.mubr.bf16.gmra.mxu0 %v681
    %v787 = vpop.f32.mrf.mxu0
    %v788 = vadd.f32 %v703, %v787
    %v789 = vpop.f32.mrf.mxu0
    %v790 = vpop.f32.mrf.mxu0
    %v791 = vpop.f32.mrf.mxu0
    %792 = vdwg.mxu0
    %793 = vmax.xlane.f32.xlu0 %v788
    %v794 = vpop.xlane.xlu0 %793
    %v795 = vsub.f32 %v788, %v794
    %v796 = vmul.f32 %v795, 1.442695
    %v797 = vpow.pop %v796
    %798 = vadd.xlane.f32.xlu0 %v797
    %v799 = vpop.xlane.xlu0 %798
    %v800 = vlog2.pop %v799
    %v801 = vmul.f32 %v800, 0.6931472
    %v802 = vsub.f32 %v795, %v801
    %803 = vst [vmem:[#allocation16] sm:$0xff] %v802
    // Predicated region
    $region64: #{decoder_rnn_decode.1} parent=1 // pred_check
      _
    $region65: #{decoder_rnn_decode.1} parent=1 // pred_check_branch
      %805 = sbr.rel (0) target = $region67
    $region66: #{decoder_rnn_decode.1} parent=1 // pred_region
      %s807 = ssub.s32 128, 128
      %808 = vsyncadd [#allocation10], %s807
      %s810 = sshll.u32 [#allocation16], 4
      %s811 = int_to_ptr.vmem [resolvable:$true] %s810
      %813 = dma.vmem_to_hbm [thread:$0]  %s811, 128, %s9, [#allocation10]
    $region67: #{decoder_rnn_decode.1} parent=1 // pred_fallthru
      _
    // Predicated region
    $region68: #{decoder_rnn_decode.1} parent=1 // pred_check
      _
    $region69: #{decoder_rnn_decode.1} parent=1 // pred_check_branch
      %815 = sbr.rel (0) target = $region71
    $region70: #{decoder_rnn_decode.1} parent=1 // pred_region
      _
    $region71: #{decoder_rnn_decode.1} parent=1 // pred_fallthru
      _
    // Predicated region
    $region72: #{decoder_rnn_decode.1} parent=1 // pred_check
      _
    $region73: #{decoder_rnn_decode.1} parent=1 // pred_check_branch
      %817 = sbr.rel (0) target = $region75
    $region74: #{decoder_rnn_decode.1} parent=1 // pred_region
      %818 = dma.done [#allocation10], 128
    $region75: #{decoder_rnn_decode.1} parent=1 // pred_fallthru
      _
    // Predicated region
    $region76: #{decoder_rnn_decode.1} parent=1 // pred_check
      _
    $region77: #{decoder_rnn_decode.1} parent=1 // pred_check_branch
      %820 = sbr.rel (0) target = $region79
    $region78: #{decoder_rnn_decode.1} parent=1 // pred_region
      _
    $region79: #{decoder_rnn_decode.1} parent=1 // pred_fallthru
      _
    %821 = vsyncpa [#allocation9], 1
    %822 = vsyncpa [#allocation12], 1
    %823 = vsyncpa [#allocation15], 1
    %824 = vsyncpa [#allocation10], 1

</llo_original>
